<compile_context>
chip_gen: v5e
topology: v5e:2x2
jax: 0.10.0
libtpu: 0.0.40
codegen_flags: <defaults>
</compile_context>

<pallas_src>
import jax
import jax.numpy as jnp
from jax import lax
from jax.experimental import pallas as pl
from jax.experimental.pallas import tpu as pltpu


# ---------------------------------------------------------------------------
# Kernel
# ---------------------------------------------------------------------------

def _score_kernel(s_ref, u_ref, b_ref, o_ref):
    """Lane-dense batch-tiled matvec:  scores_row = u @ s_tile^T + b.

    s_ref : (TILE, D)  VMEM  -- one batch tile of the streamed operand
    u_ref : (1, D)     VMEM  -- precomputed context row u = (W @ h^T)^T, resident
    b_ref : (1,)       SMEM  -- bilinear bias
    o_ref : (1, TILE)  VMEM  -- lane-dense score row for this tile
    """
    scores = lax.dot_general(
        u_ref[...], s_ref[...],
        dimension_numbers=(((1,), (1,)), ((), ())),   # contract the D axes
        preferred_element_type=jnp.float32)           # -> (1, TILE), lane-dense
    o_ref[...] = (scores + b_ref[0]).astype(o_ref.dtype)


# ---------------------------------------------------------------------------
# Wrapper
# ---------------------------------------------------------------------------

def _pick_tile(n_rows, d, requested):
    """Largest usable tile: double-buffered streamed tile stays <= ~24 MiB."""
    per_buffer_budget = 12 << 20                       # bytes for one s buffer
    max_rows = max(8, (per_buffer_budget // (d * 4)) // 8 * 8)
    tile = min(requested, max_rows)
    if tile >= n_rows:
        return n_rows                                  # one block == full array dims
    return max(8, (tile // 8) * 8)                     # sublane-aligned tile


def discriminator2_forward(s0_ll, s1_ll, h2_mean, weight, bias, *, tile_rows=1024):
    """Pallas implementation of Discriminator2.forward.

    s0_ll, s1_ll : (N, D) float32
    h2_mean      : (1, D) float32 (shared context, expand_as in PyTorch)
    weight       : (D, D) float32 (nn.Bilinear(dim, dim, 1).weight.squeeze(0))
    bias         : (1,)   float32
    returns      : (2N,)  float32 logits = cat(sc_1, sc_2)
    """
    n, d = s0_ll.shape
    assert s1_ll.shape == (n, d) and h2_mean.shape == (1, d)
    assert weight.shape == (d, d) and bias.shape == (1,)

    s0 = s0_ll.astype(jnp.float32)                     # no extra HBM pass: already f32
    s1 = s1_ll.astype(jnp.float32)
    b = bias.astype(jnp.float32)

    # Context row u = (W @ h^T)^T, computed once by plain XLA (tiny matvec;
    # keeps the full (D, D) weight out of VMEM on every chip generation).
    u_row = jnp.dot(
        weight.astype(jnp.float32), h2_mean.reshape(d, 1).astype(jnp.float32),
        preferred_element_type=jnp.float32).reshape(1, d)

    tile = _pick_tile(n, d, tile_rows)
    num_tiles = pl.cdiv(n, tile)

    # Explicit VMEM budget: 2x double-buffered s tile + u + output + headroom.
    est = 2 * tile * d * 4 + 2 * d * 4 + 2 * tile * 4
    vmem_limit = int(min(max(est + (4 << 20), 16 << 20), 48 << 20))

    score_fn = pl.pallas_call(
        _score_kernel,
        out_shape=jax.ShapeDtypeStruct((num_tiles, 1, tile), jnp.float32),
        grid_spec=pltpu.PrefetchScalarGridSpec(
            num_scalar_prefetch=0,
            grid=(num_tiles,),
            in_specs=[
                pl.BlockSpec((tile, d), lambda i: (i, 0)),            # s tile (streamed)
                pl.BlockSpec((1, d), lambda i: (0, 0)),               # u row (resident)
                pl.BlockSpec(memory_space=pltpu.MemorySpace.SMEM),    # bias
            ],
            out_specs=pl.BlockSpec((None, 1, tile), lambda i: (i, 0, 0)),
        ),
        compiler_params=pltpu.CompilerParams(
            dimension_semantics=("parallel",),          # megacore shard on v7x
            vmem_limit_bytes=vmem_limit),
        cost_estimate=pl.CostEstimate(
            flops=2 * n * d,
            transcendentals=0,
            bytes_accessed=n * d * 4 + d * 4 + num_tiles * tile * 4),
    )

    # Same compiled kernel, once per half; concat only the tiny score vectors.
    sc1 = score_fn(s0, u_row, b).reshape(num_tiles * tile)[:n]
    sc2 = score_fn(s1, u_row, b).reshape(num_tiles * tile)[:n]
    return jnp.concatenate([sc1, sc2], axis=0).astype(jnp.float32)


# ---------------------------------------------------------------------------
# Pure-JAX reference (PyTorch nn.Bilinear semantics)
# ---------------------------------------------------------------------------

def _reference(s0_ll, s1_ll, h2_mean, weight, bias):
    c = jnp.broadcast_to(h2_mean, s0_ll.shape)                        # expand_as
    sc1 = jnp.einsum("ni,ij,nj->n", s0_ll, weight, c) + bias[0]       # squeeze(1)
    sc2 = jnp.einsum("ni,ij,nj->n", s1_ll, weight, c) + bias[0]
    return jnp.concatenate([sc1, sc2], axis=0)                        # th.cat


if __name__ == "__main__":
    N, DIM = 20, 32

    key = jax.random.PRNGKey(0)
    k_s0, k_s1, k_h, k_w, k_b = jax.random.split(key, 5)

    s0_ll = jax.random.normal(k_s0, (N, DIM), dtype=jnp.float32)
    s1_ll = jax.random.normal(k_s1, (N, DIM), dtype=jnp.float32)
    h2_mean = jax.random.normal(k_h, (1, DIM), dtype=jnp.float32)

    bound = float(DIM) ** -0.5
    weight = jax.random.uniform(k_w, (DIM, DIM), jnp.float32, -bound, bound)
    bias = jax.random.uniform(k_b, (1,), jnp.float32, -bound, bound)

    ref = _reference(s0_ll, s1_ll, h2_mean, weight, bias)

    # Path 1: default tile -> one full-array block per half (num_tiles = 1).
    out_single = jax.block_until_ready(
        discriminator2_forward(s0_ll, s1_ll, h2_mean, weight, bias))
    assert out_single.shape == (2 * N,)
    assert jnp.allclose(out_single, ref, atol=1e-4, rtol=1e-4), (out_single, ref)

    # Path 2: multi-tile grid with a ragged final block (tile=8 over 20 rows).
    out_tiled = jax.block_until_ready(
        discriminator2_forward(s0_ll, s1_ll, h2_mean, weight, bias, tile_rows=8))
    assert out_tiled.shape == (2 * N,)
    assert jnp.allclose(out_tiled, ref, atol=1e-4, rtol=1e-4), (out_tiled, ref)

    print("KERNEL_OK")
</pallas_src>

<mosaic_0001>
module attributes {stable_mosaic.version = 11 : i64} {
  func.func @_score_kernel(%arg0: i32, %arg1: memref<20x32xf32, #tpu.memory_space<vmem>>, %arg2: memref<1x32xf32, #tpu.memory_space<vmem>>, %arg3: memref<1xf32, #tpu.memory_space<smem>>, %arg4: memref<1x1x20xf32, #tpu.memory_space<vmem>>) attributes {dimension_semantics = [#tpu.dimension_semantics<parallel>], iteration_bounds = array<i64: 1>, scalar_prefetch = 0 : i64, scratch_operands = 0 : i64, tpu.core_type = #tpu.core_type<tc>, window_params = [{transform_indices = @transform_0, window_bounds = array<i64: 20, 32>}, {pipeline_mode = #tpu.pipeline_mode<synchronous>, transform_indices = @transform_1, window_bounds = array<i64: 1, 32>}, {transform_indices = @transform_2, window_bounds = array<i64: 1>}, {transform_indices = @transform_3, window_bounds = array<i64: 1, 1, 20>}]} {
    %c0 = arith.constant 0 : index
    %c0_0 = arith.constant 0 : index
    %0 = vector.load %arg2[%c0, %c0_0] : memref<1x32xf32, #tpu.memory_space<vmem>>, vector<1x32xf32>
    %c0_1 = arith.constant 0 : index
    %c0_2 = arith.constant 0 : index
    %1 = vector.load %arg1[%c0_1, %c0_2] : memref<20x32xf32, #tpu.memory_space<vmem>>, vector<20x32xf32>
    %cst = arith.constant dense<0.000000e+00> : vector<1x20xf32>
    %2 = tpu.matmul %0, %1, %cst {dimension_numbers = #tpu.dot_dimension_numbers<[1], [1], [0], [0], [0, 0, 1, 0], [], []>} : vector<1x32xf32>, vector<20x32xf32>, vector<1x20xf32> -> vector<1x20xf32>
    %c0_3 = arith.constant 0 : index
    %3 = memref.load %arg3[%c0_3] : memref<1xf32, #tpu.memory_space<smem>>
    %4 = vector.broadcast %3 : f32 to vector<1x20xf32>
    %5 = arith.addf %2, %4 : vector<1x20xf32>
    %c0_4 = arith.constant 0 : index
    %c0_5 = arith.constant 0 : index
    %c0_6 = arith.constant 0 : index
    %6 = vector.load %arg4[%c0_4, %c0_5, %c0_6] : memref<1x1x20xf32, #tpu.memory_space<vmem>>, vector<1x1x20xf32>
    %7 = vector.shape_cast %6 : vector<1x1x20xf32> to vector<1x20xf32>
    %8 = vector.shape_cast %5 : vector<1x20xf32> to vector<1x1x20xf32>
    tpu.vector_store %arg4[%c0_4, %c0_5, %c0_6], %8 {strides = array<i32>} : memref<1x1x20xf32, #tpu.memory_space<vmem>>, vector<1x1x20xf32>,
    return
  }
  func.func @transform_0(%arg0: i32) -> (i32, i32) {
    %c0_i32 = arith.constant 0 : i32
    %c0_i32_0 = arith.constant 0 : i32
    return %arg0, %c0_i32 : i32, i32
  }
  func.func @transform_1(%arg0: i32) -> (i32, i32) {
    %c0_i32 = arith.constant 0 : i32
    %c0_i32_0 = arith.constant 0 : i32
    %c0_i32_1 = arith.constant 0 : i32
    return %c0_i32, %c0_i32_0 : i32, i32
  }
  func.func @transform_2(%arg0: i32) -> i32 {
    %c0_i32 = arith.constant 0 : i32
    %c0_i32_0 = arith.constant 0 : i32
    return %c0_i32 : i32
  }
  func.func @transform_3(%arg0: i32) -> (i32, i32, i32) {
    %c0_i32 = arith.constant 0 : i32
    %c0_i32_0 = arith.constant 0 : i32
    %c0_i32_1 = arith.constant 0 : i32
    return %arg0, %c0_i32, %c0_i32_0 : i32, i32, i32
  }
}

</mosaic_0001>

<llo_original>
// kernel: tpu_custom_call.1
$region0: #{tpu_custom_call.1}
  #allocation0 [shape = 'u32[]', space=smem, size = 0x4, offset = 0x4, fixed_abs, tag = 'smem constant byte address 0x4 - core index']
  #allocation1 [shape = 'u32[72,128]{1,0:T(1,128)}', space=vmem, size = 0x9000, scoped, tag = 'internal scratch']
  #allocation2 [shape = 'f32[1]{0:T(128)S(6)}', space=smem, size = 0x200, scoped, tag = 'scoped memory for tpu_custom_call.1']
  %s0 = inlined_call_operand.hbm [shape: f32[20,32], index: 0, kind: input, shape index: {}]
  %s1 = inlined_call_operand.vmem [shape: f32[1,32], index: 1, kind: input, shape index: {}]
  %s2 = inlined_call_operand.<no memory space> [shape: f32[1], index: 2, kind: input, shape index: {}]
  %s3 = inlined_call_operand.hbm [shape: f32[1,1,20], index: 3, kind: output, shape index: {}]
  %s4 = sld [smem:[#allocation0]]
  $region26: #{tpu_custom_call.1} parent=0
    _
  %s6 = ssub.s32 1, %s4
  %s7 = scalar_select 0, %s6, %s4
  %8 = sst [smem:[#allocation2]] %s2
  $region1: #{tpu_custom_call.1} parent=0
    #allocation3 [shape = 'u8[12288]{0}', space=vmem, size = 0x3000, scoped, tag = 'input window, operand 0, single buffered']
    #allocation4 [shape = 's32[1]{0}', space=sflag, size = 0x4, scoped, tag = 'scoped memory for tpu_custom_call.1']
    #allocation5 [shape = 's32[1]{0}', space=sflag, size = 0x4, scoped, tag = 'scoped memory for tpu_custom_call.1']
    #allocation6 [shape = 'u8[512]{0}', space=vmem, size = 0x400, scoped, tag = 'output window, operand 0, single buffered']
    %9 = vsyncpa [#allocation4], 0
    %10 = vsyncpa [#allocation5], 0
    // Predicated region
    $region2: #{tpu_custom_call.1} parent=1 // pred_check
      _
    $region3: #{tpu_custom_call.1} parent=1 // pred_check_branch
      %12 = sbr.rel (0) target = $region5
    $region4: #{tpu_custom_call.1} parent=1 // pred_region
      %14 = vsyncadd [#allocation4], 0
      %s15 = sshll.u32 %s0, 4
      %s16 = int_to_ptr.hbm [resolvable:$true] %s15
      %s17 = sshll.u32 [#allocation3], 4
      %s18 = int_to_ptr.vmem [resolvable:$true] %s17
      %23 = dma.hbm_to_vmem [thread:$0]  %s16, 384, %s18, [#allocation4], 128, 128, 8
    $region5: #{tpu_custom_call.1} parent=1 // pred_fallthru
      _
    // Predicated region
    $region6: #{tpu_custom_call.1} parent=1 // pred_check
      _
    $region7: #{tpu_custom_call.1} parent=1 // pred_check_branch
      %25 = sbr.rel (0) target = $region9
    $region8: #{tpu_custom_call.1} parent=1 // pred_region
      _
    $region9: #{tpu_custom_call.1} parent=1 // pred_fallthru
      _
    // Predicated region
    $region10: #{tpu_custom_call.1} parent=1 // pred_check
      _
    $region11: #{tpu_custom_call.1} parent=1 // pred_check_branch
      %27 = sbr.rel (0) target = $region13
    $region12: #{tpu_custom_call.1} parent=1 // pred_region
      _
    $region13: #{tpu_custom_call.1} parent=1 // pred_fallthru
      _
    // Predicated region
    $region14: #{tpu_custom_call.1} parent=1 // pred_check
      _
    $region15: #{tpu_custom_call.1} parent=1 // pred_check_branch
      %29 = sbr.rel (0) target = $region17
    $region16: #{tpu_custom_call.1} parent=1 // pred_region
      %31 = dma.done [#allocation4], 384
    $region17: #{tpu_custom_call.1} parent=1 // pred_fallthru
      _
    %v32 = vld [vmem:[%s1] sm:$0x1]
    %v33 = vld [vmem:[#allocation3] sm:$0xff]
    %v34 = vld [vmem:[#allocation3 + $0x8] sm:$0xff]
    %v35 = vld [vmem:[#allocation3 + $0x10] sm:$0xf]
    %s36 = sld [smem:[#allocation2]]
    %v37 = vstv %s36
    %vm38 = vcmask 261120
    %v40 = vsel %vm38, %v32, 0
    %v43 = vsel %vm38, %v33, 0
    %v46 = vsel %vm38, %v34, 0
    %v49 = vsel %vm38, %v35, 0
    %51 = vmatpush.xpose.msra.mxu0 0.0
    %52 = vmatpush.xpose.msra.mxu0 0.0
    %53 = vmatpush.xpose.msra.mxu0 0.0
    %54 = vmatpush.xpose.msra.mxu0 0.0
    %55 = vmatpush.xpose.msra.mxu0 0.0
    %56 = vmatpush.xpose.msra.mxu0 0.0
    %57 = vmatpush.xpose.msra.mxu0 0.0
    %58 = vmatpush.xpose.msra.mxu0 0.0
    %59 = vmatpush.xpose.msra.mxu0 0.0
    %60 = vmatpush.xpose.msra.mxu0 0.0
    %61 = vmatpush.xpose.msra.mxu0 0.0
    %62 = vmatpush.xpose.msra.mxu0 0.0
    %63 = vmatpush.xpose.msra.mxu0 0.0
    %64 = vmatpush.xpose.msra.mxu0 %v49
    %65 = vmatpush.xpose.msra.mxu0 %v46
    %66 = vmatpush.xpose.msra.mxu0 %v43
    %67 = vmatmul.f32.gmra.mxu0 %v40
    %v68 = vpop.f32.mrf.mxu0
    %v69 = vadd.f32 %v37, %v68
    %70 = vdwg.mxu0
    %vm71 = vcmask 155648
    %72 = vst.msk [vmem:[#allocation6] sm:$0x1] %vm71, %v69
    // Predicated region
    $region18: #{tpu_custom_call.1} parent=1 // pred_check
      _
    $region19: #{tpu_custom_call.1} parent=1 // pred_check_branch
      %74 = sbr.rel (0) target = $region21
    $region20: #{tpu_custom_call.1} parent=1 // pred_region
      %76 = vsyncadd [#allocation5], 0
      %s78 = sshll.u32 [#allocation6], 4
      %s79 = int_to_ptr.vmem [resolvable:$true] %s78
      %s80 = sshll.u32 %s3, 4
      %s81 = int_to_ptr.hbm [resolvable:$true] %s80
      %83 = dma.vmem_to_hbm [thread:$0]  %s79, 16, %s81, [#allocation5]
    $region21: #{tpu_custom_call.1} parent=1 // pred_fallthru
      _
    // Predicated region
    $region22: #{tpu_custom_call.1} parent=1 // pred_check
      _
    $region23: #{tpu_custom_call.1} parent=1 // pred_check_branch
      %85 = sbr.rel (0) target = $region25
    $region24: #{tpu_custom_call.1} parent=1 // pred_region
      %87 = dma.done [#allocation5], 16
    $region25: #{tpu_custom_call.1} parent=1 // pred_fallthru
      _
    %88 = vsyncpa [#allocation4], 1
    %89 = vsyncpa [#allocation5], 1

</llo_original>
